<compile_context>
chip_gen: v5e
topology: v5e:2x2
jax: 0.10.0
libtpu: 0.0.40
codegen_flags: <defaults>
</compile_context>

<pallas_src>
import functools
import math

import jax
import jax.numpy as jnp
from jax.experimental import pallas as pl
from jax.experimental.pallas import tpu as pltpu

D_MODEL = 512
EPS = 1e-6

# Conservative VMEM budget: v7x has only 64 MiB per TensorCore (v5e/v6e have 128 MiB),
# so cap the per-step working set well below that.
_VMEM_BUDGET = 48 * 1024 * 1024
# Most-conservative default scoped-VMEM limit (v5e: 16 MiB); only raise the limit if
# our estimate would not fit under it.
_DEFAULT_SCOPED_VMEM = 12 * 1024 * 1024


def layernorm_kernel(x_ref, a_ref, b_ref, o_ref, *, eps):
    x = x_ref[...].astype(jnp.float32)              # (tile_rows, d)
    d = x.shape[-1]
    # Two-pass statistics inside the tile: matches the reference math exactly
    # (no catastrophic cancellation), and the extra XLU reduction is free in this
    # memory-bound kernel.
    mean = jnp.sum(x, axis=-1, keepdims=True) * (1.0 / d)
    xc = x - mean
    # torch.std() default: unbiased variance (ddof = 1)
    var = jnp.sum(xc * xc, axis=-1, keepdims=True) * (1.0 / (d - 1))
    std = jnp.sqrt(var)
    # Exact per-row reciprocal (tile_rows divides only), then a broadcast multiply on
    # the VPU — avoids a full-tile divide while keeping f32-exact parity.
    inv = 1.0 / (std + eps)
    a = a_ref[...].astype(jnp.float32)              # (1, d)
    b = b_ref[...].astype(jnp.float32)              # (1, d)
    o_ref[...] = (a * (xc * inv) + b).astype(o_ref.dtype)


def _estimate_vmem_bytes(tile_rows, d, itemsize):
    # in + out blocks, double-buffered (input dtype) ...
    io = 4 * tile_rows * d * itemsize
    # ... plus full-tile f32 intermediates the kernel materializes
    # (x.astype(f32), centered, product before cast).
    tmp = 3 * tile_rows * d * 4
    # scale / bias blocks (double-buffered, f32-ish upper bound).
    params = 8 * d * 4
    return io + tmp + params


def layer_norm(x, a, b, *, eps=EPS, tile_rows=2048):
    orig_shape = x.shape
    d = orig_shape[-1]
    assert a.shape == (d,) and b.shape == (d,)
    # d=512 keeps the output store lane-dense (unmasked vst). If d were not a
    # multiple of 128 the block still equals the full last dim (legal), just slower.
    # TODO(synk): pad the feature dim to a multiple of 128 for such callers.
    rows = math.prod(orig_shape[:-1])
    x2 = x.reshape(rows, d)
    a2 = a.reshape(1, d)
    b2 = b.reshape(1, d)

    itemsize = jnp.dtype(x.dtype).itemsize
    # Row alignment: 16 covers f32 (8) and bf16 (16) sublane packing; sub-byte /
    # 8-bit dtypes need 32-row tiles.
    row_align = 32 if itemsize < 2 else 16

    # Don't allocate a block far larger than the whole (row-padded) input.
    max_useful = ((rows + row_align - 1) // row_align) * row_align
    tr = max(row_align, min(int(tile_rows), max_useful))
    tr = ((tr + row_align - 1) // row_align) * row_align

    # Clamp the row tile so the per-step working set (I/O double-buffers + f32
    # intermediates) stays under the VMEM budget on every TPU generation.
    per_row = 4 * d * itemsize + 3 * d * 4
    tr_cap = max(row_align, ((_VMEM_BUDGET - 8 * d * 4) // per_row) // row_align * row_align)
    tr = min(tr, tr_cap)

    # No jnp.pad: let Pallas mask the partial last block.
    grid = (pl.cdiv(rows, tr),)

    needed = _estimate_vmem_bytes(tr, d, itemsize)
    cp_kwargs = dict(dimension_semantics=("parallel",))
    if needed > _DEFAULT_SCOPED_VMEM:
        cp_kwargs["vmem_limit_bytes"] = int(min(needed * 1.3, _VMEM_BUDGET))
    # TODO(synk): on v7x (2 TCs/chip) verify the "parallel" grid axis is sharded
    # across both cores; if not, switch to pltpu.CORE_PARALLEL / core_map.

    out = pl.pallas_call(
        functools.partial(layernorm_kernel, eps=eps),
        out_shape=jax.ShapeDtypeStruct((rows, d), x.dtype),
        grid_spec=pltpu.PrefetchScalarGridSpec(
            num_scalar_prefetch=0,
            grid=grid,
            in_specs=[
                pl.BlockSpec((tr, d), lambda i: (i, 0)),
                pl.BlockSpec((1, d), lambda i: (0, 0)),
                pl.BlockSpec((1, d), lambda i: (0, 0)),
            ],
            out_specs=pl.BlockSpec((tr, d), lambda i: (i, 0)),
        ),
        compiler_params=pltpu.CompilerParams(**cp_kwargs),
    )(x2, a2, b2)

    return out.reshape(orig_shape)


if __name__ == "__main__":
    key = jax.random.PRNGKey(0)

    # Deterministic parameter init, matching nn.Parameter(torch.ones/zeros).
    a = jnp.ones((D_MODEL,), dtype=jnp.float32)
    b = jnp.zeros((D_MODEL,), dtype=jnp.float32)

    def reference(x):
        mean = jnp.mean(x, axis=-1, keepdims=True)
        var = jnp.sum((x - mean) ** 2, axis=-1, keepdims=True) / (x.shape[-1] - 1)
        std = jnp.sqrt(var)
        return a * (x - mean) / (std + EPS) + b

    k1, k2 = jax.random.split(key)

    # Small shape consistent with the transformer module: [batch, seq, d_model].
    x_small = jax.random.normal(k1, (2, 8, D_MODEL), dtype=jnp.float32)
    out_small = jax.block_until_ready(layer_norm(x_small, a, b))
    assert jnp.allclose(out_small, reference(x_small), atol=1e-4, rtol=1e-4), \
        "mismatch vs reference (small case)"

    # Second case exercises a multi-block grid with a masked partial last block
    # (rows=1200, tile=512 -> grid=3, last block 176 valid rows) — no jnp.pad needed.
    x_tail = jax.random.normal(k2, (3, 400, D_MODEL), dtype=jnp.float32)
    out_tail = jax.block_until_ready(layer_norm(x_tail, a, b, tile_rows=512))
    assert jnp.allclose(out_tail, reference(x_tail), atol=1e-4, rtol=1e-4), \
        "mismatch vs reference (partial-block case)"

    # Third case uses the large default tile (single 1200-row block).
    out_big = jax.block_until_ready(layer_norm(x_tail, a, b))
    assert jnp.allclose(out_big, reference(x_tail), atol=1e-4, rtol=1e-4), \
        "mismatch vs reference (default-tile case)"

    print("KERNEL_OK")
</pallas_src>

<mosaic_0001>
module attributes {stable_mosaic.version = 11 : i64} {
  func.func @layernorm_kernel(%arg0: i32, %arg1: memref<16x512xf32, #tpu.memory_space<vmem>>, %arg2: memref<1x512xf32, #tpu.memory_space<vmem>>, %arg3: memref<1x512xf32, #tpu.memory_space<vmem>>, %arg4: memref<16x512xf32, #tpu.memory_space<vmem>>) attributes {dimension_semantics = [#tpu.dimension_semantics<parallel>], iteration_bounds = array<i64: 1>, scalar_prefetch = 0 : i64, scratch_operands = 0 : i64, tpu.core_type = #tpu.core_type<tc>, window_params = [{transform_indices = @transform_0, window_bounds = array<i64: 16, 512>}, {pipeline_mode = #tpu.pipeline_mode<synchronous>, transform_indices = @transform_1, window_bounds = array<i64: 1, 512>}, {pipeline_mode = #tpu.pipeline_mode<synchronous>, transform_indices = @transform_2, window_bounds = array<i64: 1, 512>}, {transform_indices = @transform_3, window_bounds = array<i64: 16, 512>}]} {
    %c0 = arith.constant 0 : index
    %c0_0 = arith.constant 0 : index
    %0 = vector.load %arg1[%c0, %c0_0] : memref<16x512xf32, #tpu.memory_space<vmem>>, vector<16x512xf32>
    %cst = arith.constant dense<0.000000e+00> : vector<16xf32>
    %1 = vector.multi_reduction <add>, %0, %cst [1] : vector<16x512xf32> to vector<16xf32>
    %2 = vector.shape_cast %1 : vector<16xf32> to vector<16x1xf32>
    %cst_1 = arith.constant 0.001953125 : f32
    %3 = vector.broadcast %cst_1 : f32 to vector<16x1xf32>
    %4 = arith.mulf %2, %3 : vector<16x1xf32>
    %5 = vector.broadcast %4 : vector<16x1xf32> to vector<16x512xf32>
    %6 = arith.subf %0, %5 : vector<16x512xf32>
    %7 = arith.mulf %6, %6 : vector<16x512xf32>
    %cst_2 = arith.constant dense<0.000000e+00> : vector<16xf32>
    %8 = vector.multi_reduction <add>, %7, %cst_2 [1] : vector<16x512xf32> to vector<16xf32>
    %9 = vector.shape_cast %8 : vector<16xf32> to vector<16x1xf32>
    %cst_3 = arith.constant 0.00195694715 : f32
    %10 = vector.broadcast %cst_3 : f32 to vector<16x1xf32>
    %11 = arith.mulf %9, %10 : vector<16x1xf32>
    %12 = math.sqrt %11 : vector<16x1xf32>
    %cst_4 = arith.constant 9.99999997E-7 : f32
    %13 = vector.broadcast %cst_4 : f32 to vector<16x1xf32>
    %14 = arith.addf %12, %13 : vector<16x1xf32>
    %cst_5 = arith.constant 1.000000e+00 : f32
    %15 = vector.broadcast %cst_5 : f32 to vector<16x1xf32>
    %16 = arith.divf %15, %14 : vector<16x1xf32>
    %c0_6 = arith.constant 0 : index
    %c0_7 = arith.constant 0 : index
    %17 = vector.load %arg2[%c0_6, %c0_7] : memref<1x512xf32, #tpu.memory_space<vmem>>, vector<1x512xf32>
    %c0_8 = arith.constant 0 : index
    %c0_9 = arith.constant 0 : index
    %18 = vector.load %arg3[%c0_8, %c0_9] : memref<1x512xf32, #tpu.memory_space<vmem>>, vector<1x512xf32>
    %19 = vector.broadcast %16 : vector<16x1xf32> to vector<16x512xf32>
    %20 = arith.mulf %6, %19 : vector<16x512xf32>
    %21 = vector.broadcast %17 : vector<1x512xf32> to vector<16x512xf32>
    %22 = arith.mulf %21, %20 : vector<16x512xf32>
    %23 = vector.broadcast %18 : vector<1x512xf32> to vector<16x512xf32>
    %24 = arith.addf %22, %23 : vector<16x512xf32>
    %c0_10 = arith.constant 0 : index
    %c0_11 = arith.constant 0 : index
    %25 = vector.load %arg4[%c0_10, %c0_11] : memref<16x512xf32, #tpu.memory_space<vmem>>, vector<16x512xf32>
    tpu.vector_store %arg4[%c0_10, %c0_11], %24 {strides = array<i32>} : memref<16x512xf32, #tpu.memory_space<vmem>>, vector<16x512xf32>,
    return
  }
  func.func @transform_0(%arg0: i32) -> (i32, i32) {
    %c0_i32 = arith.constant 0 : i32
    %c0_i32_0 = arith.constant 0 : i32
    return %arg0, %c0_i32 : i32, i32
  }
  func.func @transform_1(%arg0: i32) -> (i32, i32) {
    %c0_i32 = arith.constant 0 : i32
    %c0_i32_0 = arith.constant 0 : i32
    %c0_i32_1 = arith.constant 0 : i32
    return %c0_i32, %c0_i32_0 : i32, i32
  }
  func.func @transform_2(%arg0: i32) -> (i32, i32) {
    %c0_i32 = arith.constant 0 : i32
    %c0_i32_0 = arith.constant 0 : i32
    %c0_i32_1 = arith.constant 0 : i32
    return %c0_i32, %c0_i32_0 : i32, i32
  }
  func.func @transform_3(%arg0: i32) -> (i32, i32) {
    %c0_i32 = arith.constant 0 : i32
    %c0_i32_0 = arith.constant 0 : i32
    return %arg0, %c0_i32 : i32, i32
  }
}

</mosaic_0001>

<llo_original>
// kernel: tpu_custom_call.1
$region0: #{tpu_custom_call.1}
  #allocation0 [shape = 'u32[]', space=smem, size = 0x4, offset = 0x4, fixed_abs, tag = 'smem constant byte address 0x4 - core index']
  #allocation1 [shape = 'u32[72,128]{1,0:T(1,128)}', space=vmem, size = 0x9000, scoped, tag = 'internal scratch']
  %s0 = inlined_call_operand.hbm [shape: f32[16,512], index: 0, kind: input, shape index: {}]
  %s1 = inlined_call_operand.hbm [shape: f32[1,512], index: 1, kind: input, shape index: {}]
  %s2 = inlined_call_operand.hbm [shape: f32[1,512], index: 2, kind: input, shape index: {}]
  %s3 = inlined_call_operand.hbm [shape: f32[16,512], index: 3, kind: output, shape index: {}]
  %s4 = sld [smem:[#allocation0]]
  $region34: #{tpu_custom_call.1} parent=0
    _
  %s6 = ssub.s32 1, %s4
  %s7 = scalar_select 0, %s6, %s4
  $region1: #{tpu_custom_call.1} parent=0
    #allocation2 [shape = 'u8[32768]{0}', space=vmem, size = 0x8000, scoped, tag = 'input window, operand 0, single buffered']
    #allocation3 [shape = 's32[1]{0}', space=sflag, size = 0x4, scoped, tag = 'scoped memory for tpu_custom_call.1']
    #allocation4 [shape = 's32[1]{0}', space=sflag, size = 0x4, scoped, tag = 'scoped memory for tpu_custom_call.1']
    #allocation5 [shape = 'u8[2048]{0}', space=vmem, size = 0x800, scoped, tag = 'input window, operand 1, single buffered']
    #allocation6 [shape = 's32[1]{0}', space=sflag, size = 0x4, scoped, tag = 'scoped memory for tpu_custom_call.1']
    #allocation7 [shape = 'u8[2048]{0}', space=vmem, size = 0x800, scoped, tag = 'input window, operand 2, single buffered']
    #allocation8 [shape = 'u8[32768]{0}', space=vmem, size = 0x8000, scoped, tag = 'output window, operand 0, single buffered']
    %8 = vsyncpa [#allocation3], 0
    %9 = vsyncpa [#allocation6], 0
    %10 = vsyncpa [#allocation4], 0
    // Predicated region
    $region2: #{tpu_custom_call.1} parent=1 // pred_check
      _
    $region3: #{tpu_custom_call.1} parent=1 // pred_check_branch
      %12 = sbr.rel (0) target = $region5
    $region4: #{tpu_custom_call.1} parent=1 // pred_region
      %14 = vsyncadd [#allocation3], 0
      %s15 = sshll.u32 %s0, 4
      %s16 = int_to_ptr.hbm [resolvable:$true] %s15
      %s17 = sshll.u32 [#allocation2], 4
      %s18 = int_to_ptr.vmem [resolvable:$true] %s17
      %23 = dma.hbm_to_vmem [thread:$0]  %s16, 1024, %s18, [#allocation3], 512, 512, 32
    $region5: #{tpu_custom_call.1} parent=1 // pred_fallthru
      _
    // Predicated region
    $region6: #{tpu_custom_call.1} parent=1 // pred_check
      _
    $region7: #{tpu_custom_call.1} parent=1 // pred_check_branch
      %25 = sbr.rel (0) target = $region9
    $region8: #{tpu_custom_call.1} parent=1 // pred_region
      %27 = vsyncadd [#allocation6], 0
      %s29 = sshll.u32 %s1, 4
      %s30 = int_to_ptr.hbm [resolvable:$true] %s29
      %s31 = sshll.u32 [#allocation5], 4
      %s32 = int_to_ptr.vmem [resolvable:$true] %s31
      %34 = dma.hbm_to_vmem [thread:$0]  %s30, 64, %s32, [#allocation6]
    $region9: #{tpu_custom_call.1} parent=1 // pred_fallthru
      _
    // Predicated region
    $region10: #{tpu_custom_call.1} parent=1 // pred_check
      _
    $region11: #{tpu_custom_call.1} parent=1 // pred_check_branch
      %36 = sbr.rel (0) target = $region13
    $region12: #{tpu_custom_call.1} parent=1 // pred_region
      %38 = vsyncadd [#allocation6], 0
      %s40 = sshll.u32 %s2, 4
      %s41 = int_to_ptr.hbm [resolvable:$true] %s40
      %s42 = sshll.u32 [#allocation7], 4
      %s43 = int_to_ptr.vmem [resolvable:$true] %s42
      %45 = dma.hbm_to_vmem [thread:$0]  %s41, 64, %s43, [#allocation6]
    $region13: #{tpu_custom_call.1} parent=1 // pred_fallthru
      _
    // Predicated region
    $region14: #{tpu_custom_call.1} parent=1 // pred_check
      _
    $region15: #{tpu_custom_call.1} parent=1 // pred_check_branch
      %47 = sbr.rel (0) target = $region17
    $region16: #{tpu_custom_call.1} parent=1 // pred_region
      %49 = dma.done [#allocation3], 1024
    $region17: #{tpu_custom_call.1} parent=1 // pred_fallthru
      _
    // Predicated region
    $region18: #{tpu_custom_call.1} parent=1 // pred_check
      _
    $region19: #{tpu_custom_call.1} parent=1 // pred_check_branch
      %51 = sbr.rel (0) target = $region21
    $region20: #{tpu_custom_call.1} parent=1 // pred_region
      %53 = dma.done [#allocation6], 64
    $region21: #{tpu_custom_call.1} parent=1 // pred_fallthru
      _
    // Predicated region
    $region22: #{tpu_custom_call.1} parent=1 // pred_check
      _
    $region23: #{tpu_custom_call.1} parent=1 // pred_check_branch
      %55 = sbr.rel (0) target = $region25
    $region24: #{tpu_custom_call.1} parent=1 // pred_region
      %57 = dma.done [#allocation6], 64
    $region25: #{tpu_custom_call.1} parent=1 // pred_fallthru
      _
    %v58 = vld [vmem:[#allocation2] sm:$0xff]
    %v59 = vld [vmem:[#allocation2 + $0x8] sm:$0xff]
    %v60 = vld [vmem:[#allocation2 + $0x10] sm:$0xff]
    %v61 = vld [vmem:[#allocation2 + $0x18] sm:$0xff]
    %v62 = vld [vmem:[#allocation2 + $0x20] sm:$0xff]
    %v63 = vld [vmem:[#allocation2 + $0x28] sm:$0xff]
    %v64 = vld [vmem:[#allocation2 + $0x30] sm:$0xff]
    %v65 = vld [vmem:[#allocation2 + $0x38] sm:$0xff]
    %v66 = vadd.f32 %v58, %v59
    %v67 = vadd.f32 %v66, %v60
    %v68 = vadd.f32 %v67, %v61
    %69 = vadd.xlane.f32.xlu0 %v68
    %v70 = vpop.xlane.xlu0 %69
    %v71 = vadd.f32 %v62, %v63
    %v72 = vadd.f32 %v71, %v64
    %v73 = vadd.f32 %v72, %v65
    %74 = vadd.xlane.f32.xlu0 %v73
    %v75 = vpop.xlane.xlu0 %74
    %v76 = vmul.f32 %v70, 0.001953125
    %v77 = vmul.f32 %v75, 0.001953125
    %v78 = vsub.f32 %v58, %v76
    %v79 = vsub.f32 %v59, %v76
    %v80 = vsub.f32 %v60, %v76
    %v81 = vsub.f32 %v61, %v76
    %v82 = vsub.f32 %v62, %v77
    %v83 = vsub.f32 %v63, %v77
    %v84 = vsub.f32 %v64, %v77
    %v85 = vsub.f32 %v65, %v77
    %v86 = vmul.f32 %v78, %v78
    %v87 = vmul.f32 %v79, %v79
    %v88 = vmul.f32 %v80, %v80
    %v89 = vmul.f32 %v81, %v81
    %v90 = vmul.f32 %v82, %v82
    %v91 = vmul.f32 %v83, %v83
    %v92 = vmul.f32 %v84, %v84
    %v93 = vmul.f32 %v85, %v85
    %v94 = vadd.f32 %v86, %v87
    %v95 = vadd.f32 %v94, %v88
    %v96 = vadd.f32 %v95, %v89
    %97 = vadd.xlane.f32.xlu0 %v96
    %v98 = vpop.xlane.xlu0 %97
    %v99 = vadd.f32 %v90, %v91
    %v100 = vadd.f32 %v99, %v92
    %v101 = vadd.f32 %v100, %v93
    %102 = vadd.xlane.f32.xlu0 %v101
    %v103 = vpop.xlane.xlu0 %102
    %v104 = vmul.f32 %v98, 0.0019569471
    %v105 = vmul.f32 %v103, 0.0019569471
    %v106 = vrsqrt.pop %v104
    %v107 = vmul.f32 %v106, %v104
    %v108 = vmul.f32 %v107, %v106
    %v109 = vmul.f32 0.5, %v108
    %v110 = vsub.f32 1.5, %v109
    %v111 = vmul.f32 %v106, %v110
    %v112 = vmul.f32 %v104, %v111
    %vm113 = vcmp.eq.f32.partialorder %v104, inf
    %v114 = vsel %vm113, %v104, %v112
    %vm115 = vcmp.eq.f32.partialorder %v104, 0.0
    %v116 = vand.u32 %v104, 2147483648
    %v117 = vsel %vm115, %v116, %v114
    %v118 = vrsqrt.pop %v105
    %v119 = vmul.f32 %v118, %v105
    %v120 = vmul.f32 %v119, %v118
    %v121 = vmul.f32 0.5, %v120
    %v122 = vsub.f32 1.5, %v121
    %v123 = vmul.f32 %v118, %v122
    %v124 = vmul.f32 %v105, %v123
    %vm125 = vcmp.eq.f32.partialorder %v105, inf
    %v126 = vsel %vm125, %v105, %v124
    %vm127 = vcmp.eq.f32.partialorder %v105, 0.0
    %v128 = vand.u32 %v105, 2147483648
    %v129 = vsel %vm127, %v128, %v126
    %v130 = vadd.f32 %v117, 1e-06
    %v131 = vadd.f32 %v129, 1e-06
    %v132 = vrcp.pop %v130
    %v133 = vmul.f32 %v130, %v132
    %v134 = vsub.f32 1.0, %v133
    %v135 = vmul.f32 %v132, %v134
    %v136 = vadd.f32 %v132, %v135
    %vm137 = vweird.f32 %v130
    %vm138 = vweird.f32 %v132
    %vm139 = vmor %vm137, %vm138
    %v140 = vsel %vm139, %v132, %v136
    %v141 = vand.u32 2147483647, %v130
    %vm142 = vcmp.eq.f32.partialorder %v141, 8.507059e+37
    %v143 = vand.u32 %v130, 2147483648
    %v144 = vor.u32 1.1754944e-38, %v143
    %v145 = vsel %vm142, %v144, %v140
    %v146 = vmul.f32 1.0, %v145
    %v147 = vrcp.pop %v131
    %v148 = vmul.f32 %v131, %v147
    %v149 = vsub.f32 1.0, %v148
    %v150 = vmul.f32 %v147, %v149
    %v151 = vadd.f32 %v147, %v150
    %vm152 = vweird.f32 %v131
    %vm153 = vweird.f32 %v147
    %vm154 = vmor %vm152, %vm153
    %v155 = vsel %vm154, %v147, %v151
    %v156 = vand.u32 2147483647, %v131
    %vm157 = vcmp.eq.f32.partialorder %v156, 8.507059e+37
    %v158 = vand.u32 %v131, 2147483648
    %v159 = vor.u32 1.1754944e-38, %v158
    %v160 = vsel %vm157, %v159, %v155
    %v161 = vmul.f32 1.0, %v160
    %v162 = vld [vmem:[#allocation5] sm:$0xf]
    %v163 = vld [vmem:[#allocation7] sm:$0xf]
    %v164 = vmul.f32 %v78, %v146
    %v165 = vmul.f32 %v79, %v146
    %v166 = vmul.f32 %v80, %v146
    %v167 = vmul.f32 %v81, %v146
    %v168 = vmul.f32 %v82, %v161
    %v169 = vmul.f32 %v83, %v161
    %v170 = vmul.f32 %v84, %v161
    %v171 = vmul.f32 %v85, %v161
    %v173 = vperm.slane %v162, 0
    %v174 = vperm.slane %v162, 1
    %v175 = vperm.slane %v162, 2
    %v176 = vperm.slane %v162, 3
    %v181 = vmul.f32 %v173, %v164
    %v182 = vmul.f32 %v174, %v165
    %v183 = vmul.f32 %v175, %v166
    %v184 = vmul.f32 %v176, %v167
    %v185 = vmul.f32 %v173, %v168
    %v186 = vmul.f32 %v174, %v169
    %v187 = vmul.f32 %v175, %v170
    %v188 = vmul.f32 %v176, %v171
    %v190 = vperm.slane %v163, 0
    %v191 = vperm.slane %v163, 1
    %v192 = vperm.slane %v163, 2
    %v193 = vperm.slane %v163, 3
    %v198 = vadd.f32 %v181, %v190
    %v199 = vadd.f32 %v182, %v191
    %v200 = vadd.f32 %v183, %v192
    %v201 = vadd.f32 %v184, %v193
    %v202 = vadd.f32 %v185, %v190
    %v203 = vadd.f32 %v186, %v191
    %v204 = vadd.f32 %v187, %v192
    %v205 = vadd.f32 %v188, %v193
    %206 = vst [vmem:[#allocation8] sm:$0xff] %v198
    %207 = vst [vmem:[#allocation8 + $0x8] sm:$0xff] %v199
    %208 = vst [vmem:[#allocation8 + $0x10] sm:$0xff] %v200
    %209 = vst [vmem:[#allocation8 + $0x18] sm:$0xff] %v201
    %210 = vst [vmem:[#allocation8 + $0x20] sm:$0xff] %v202
    %211 = vst [vmem:[#allocation8 + $0x28] sm:$0xff] %v203
    %212 = vst [vmem:[#allocation8 + $0x30] sm:$0xff] %v204
    %213 = vst [vmem:[#allocation8 + $0x38] sm:$0xff] %v205
    // Predicated region
    $region26: #{tpu_custom_call.1} parent=1 // pred_check
      _
    $region27: #{tpu_custom_call.1} parent=1 // pred_check_branch
      %215 = sbr.rel (0) target = $region29
    $region28: #{tpu_custom_call.1} parent=1 // pred_region
      %217 = vsyncadd [#allocation4], 0
      %s218 = sshll.u32 [#allocation8], 4
      %s219 = int_to_ptr.vmem [resolvable:$true] %s218
      %s220 = sshll.u32 %s3, 4
      %s221 = int_to_ptr.hbm [resolvable:$true] %s220
      %226 = dma.vmem_to_hbm [thread:$0]  %s219, 1024, %s221, [#allocation4], 512, 512, 32
    $region29: #{tpu_custom_call.1} parent=1 // pred_fallthru
      _
    // Predicated region
    $region30: #{tpu_custom_call.1} parent=1 // pred_check
      _
    $region31: #{tpu_custom_call.1} parent=1 // pred_check_branch
      %228 = sbr.rel (0) target = $region33
    $region32: #{tpu_custom_call.1} parent=1 // pred_region
      %230 = dma.done [#allocation4], 1024
    $region33: #{tpu_custom_call.1} parent=1 // pred_fallthru
      _
    %231 = vsyncpa [#allocation3], 1
    %232 = vsyncpa [#allocation6], 1
    %233 = vsyncpa [#allocation4], 1

</llo_original>
